<compile_context>
chip_gen: v6e
topology: v6e:2x2x1
jax: 0.10.0
libtpu: 0.0.40
codegen_flags: <defaults>
</compile_context>

<pallas_src>
import jax
import jax.numpy as jnp
from jax.experimental import pallas as pl
from jax.experimental.pallas import tpu as pltpu


def mlp_kernel(params_ref, x_ref, out_ref):
    """Fused Linear(4,2) -> ReLU -> Linear(2,1) on sublane/lane-dense tiles.

    params_ref: SMEM f32[16] =
        [w00,w01, w10,w11, w20,w21, w30,w31,   # l0 weight, (in,out) row-major
         b0_0,b0_1,                            # l0 bias
         w1_0,w1_1,                            # l1 weight
         b1_0, <pad x3>]                       # l1 bias
    x_ref:   VMEM (4, rb, 128)  -- feature x sublane-rows x lanes
    out_ref: VMEM (rb, 128)
    """
    x0 = x_ref[0]                        # (rb, 128) f32, dense vregs
    x1 = x_ref[1]
    x2 = x_ref[2]
    x3 = x_ref[3]

    # Hidden layer: h_j = sum_k x_k * w0[k, j] + b0[j]   (unrolled VPU FMAs)
    h0 = (x0 * params_ref[0] + x1 * params_ref[2]
          + x2 * params_ref[4] + x3 * params_ref[6] + params_ref[8])
    h1 = (x0 * params_ref[1] + x1 * params_ref[3]
          + x2 * params_ref[5] + x3 * params_ref[7] + params_ref[9])
    h0 = jnp.maximum(h0, 0.0)            # ReLU
    h1 = jnp.maximum(h1, 0.0)

    # Output layer: y = h0 * w1[0] + h1 * w1[1] + b1
    out_ref[...] = h0 * params_ref[10] + h1 * params_ref[11] + params_ref[12]


def mymodel_forward(x, w0, b0, w1, b1, *, block_b=262144):
    """x: (B, 4) f32.  w0: (4, 2), b0: (2,), w1: (2, 1), b1: (1,). Returns (B, 1)."""
    B = x.shape[0]
    assert x.shape[1] == 4

    # Pack the 13 parameters into one SMEM slab (padded to 16 scalars).
    params = jnp.concatenate(
        [w0.reshape(-1), b0.reshape(-1), w1.reshape(-1), b1.reshape(-1)]
    ).astype(jnp.float32)
    params = jnp.pad(params, (0, 16 - params.shape[0]))

    # Pad batch only up to a 128-lane multiple; cast+pad+transpose fuse into a
    # single HBM copy under jit, the trailing reshape is free (contiguous).
    Bp = pl.cdiv(B, 128) * 128
    x32 = x.astype(jnp.float32)
    if Bp != B:
        x32 = jnp.pad(x32, ((0, Bp - B), (0, 0)))
    xr = x32.T.reshape(4, Bp // 128, 128)          # (feature, sublane-row, lane)

    # Tile the sublane-row axis. rb is a multiple of 8 (or == full extent).
    R = Bp // 128
    rb_cap = max(8, (block_b // 128 // 8) * 8)     # rows per block from block_b
    if R <= rb_cap:
        # Whole batch fits one block: split ~in half (8-row aligned) so the
        # "parallel" grid axis has >= 2 steps to feed both v7x TensorCores.
        rb = max(8, pl.cdiv(pl.cdiv(R, 2), 8) * 8) if R >= 16 else R
    else:
        rb = rb_cap
    grid = (pl.cdiv(R, rb),)                       # partial final block is OK

    out = pl.pallas_call(
        mlp_kernel,
        out_shape=jax.ShapeDtypeStruct((R, 128), jnp.float32),
        grid=grid,
        in_specs=[
            pl.BlockSpec(memory_space=pltpu.MemorySpace.SMEM),   # params, untiled
            pl.BlockSpec((4, rb, 128), lambda i: (0, i, 0)),     # x batch tile
        ],
        out_specs=pl.BlockSpec((rb, 128), lambda i: (i, 0)),
        compiler_params=pltpu.CompilerParams(
            dimension_semantics=("parallel",),     # shard batch across TCs (v7x)
        ),
    )(params, xr)

    # Back to PyTorch layout (B, 1); padded tail columns are dropped here.
    return out.reshape(-1)[:B].reshape(B, 1)


def reference_forward(x, w0, b0, w1, b1):
    h = jnp.maximum(x @ w0 + b0, 0.0)
    return h @ w1 + b1


if __name__ == "__main__":
    key = jax.random.PRNGKey(0)
    k_x, k_w0, k_b0, k_w1, k_b1 = jax.random.split(key, 5)

    # PyTorch Linear params, stored pre-transposed to (in, out) for the kernel.
    w0 = jax.random.normal(k_w0, (4, 2), dtype=jnp.float32) * 0.5
    b0 = jax.random.normal(k_b0, (2,), dtype=jnp.float32) * 0.1
    w1 = jax.random.normal(k_w1, (2, 1), dtype=jnp.float32) * 0.5
    b1 = jax.random.normal(k_b1, (1,), dtype=jnp.float32) * 0.1

    fwd = jax.jit(mymodel_forward, static_argnames=("block_b",))

    # Cover: B < 128, B not a multiple of 128, exactly-full block, and a
    # multi-step grid with a partial final block (small block_b).
    for B, blk in [(2, 262144), (100, 262144), (256, 262144), (4200, 2048)]:
        x = jax.random.normal(jax.random.fold_in(k_x, B), (B, 4),
                              dtype=jnp.float32)
        out = fwd(x, w0, b0, w1, b1, block_b=blk)
        jax.block_until_ready(out)
        ref = reference_forward(x, w0, b0, w1, b1)
        assert out.shape == (B, 1), (B, out.shape)
        assert jnp.allclose(out, ref, atol=1e-5, rtol=1e-5), (B, out, ref)

    print("KERNEL_OK")
</pallas_src>

<mosaic_0001>
module attributes {stable_mosaic.version = 11 : i64} {
  func.func @mlp_kernel(%arg0: i32, %arg1: memref<16xf32, #tpu.memory_space<smem>>, %arg2: memref<4x1x128xf32, #tpu.memory_space<vmem>>, %arg3: memref<1x128xf32, #tpu.memory_space<vmem>>) attributes {dimension_semantics = [#tpu.dimension_semantics<parallel>], iteration_bounds = array<i64: 1>, scalar_prefetch = 0 : i64, scratch_operands = 0 : i64, tpu.core_type = #tpu.core_type<tc>, window_params = [{transform_indices = @transform_0, window_bounds = array<i64: 16>}, {transform_indices = @transform_1, window_bounds = array<i64: 4, 1, 128>}, {transform_indices = @transform_2, window_bounds = array<i64: 1, 128>}]} {
    %c0 = arith.constant 0 : index
    %c0_0 = arith.constant 0 : index
    %c0_1 = arith.constant 0 : index
    %0 = vector.load %arg2[%c0, %c0_0, %c0_1] : memref<4x1x128xf32, #tpu.memory_space<vmem>>, vector<1x1x128xf32>
    %1 = vector.shape_cast %0 : vector<1x1x128xf32> to vector<1x128xf32>
    %c1 = arith.constant 1 : index
    %c0_2 = arith.constant 0 : index
    %c0_3 = arith.constant 0 : index
    %2 = vector.load %arg2[%c1, %c0_2, %c0_3] : memref<4x1x128xf32, #tpu.memory_space<vmem>>, vector<1x1x128xf32>
    %3 = vector.shape_cast %2 : vector<1x1x128xf32> to vector<1x128xf32>
    %c2 = arith.constant 2 : index
    %c0_4 = arith.constant 0 : index
    %c0_5 = arith.constant 0 : index
    %4 = vector.load %arg2[%c2, %c0_4, %c0_5] : memref<4x1x128xf32, #tpu.memory_space<vmem>>, vector<1x1x128xf32>
    %5 = vector.shape_cast %4 : vector<1x1x128xf32> to vector<1x128xf32>
    %c3 = arith.constant 3 : index
    %c0_6 = arith.constant 0 : index
    %c0_7 = arith.constant 0 : index
    %6 = vector.load %arg2[%c3, %c0_6, %c0_7] : memref<4x1x128xf32, #tpu.memory_space<vmem>>, vector<1x1x128xf32>
    %7 = vector.shape_cast %6 : vector<1x1x128xf32> to vector<1x128xf32>
    %c0_8 = arith.constant 0 : index
    %8 = memref.load %arg1[%c0_8] : memref<16xf32, #tpu.memory_space<smem>>
    %9 = vector.broadcast %8 : f32 to vector<1x128xf32>
    %10 = arith.mulf %1, %9 : vector<1x128xf32>
    %c2_9 = arith.constant 2 : index
    %11 = memref.load %arg1[%c2_9] : memref<16xf32, #tpu.memory_space<smem>>
    %12 = vector.broadcast %11 : f32 to vector<1x128xf32>
    %13 = arith.mulf %3, %12 : vector<1x128xf32>
    %14 = arith.addf %10, %13 : vector<1x128xf32>
    %c4 = arith.constant 4 : index
    %15 = memref.load %arg1[%c4] : memref<16xf32, #tpu.memory_space<smem>>
    %16 = vector.broadcast %15 : f32 to vector<1x128xf32>
    %17 = arith.mulf %5, %16 : vector<1x128xf32>
    %18 = arith.addf %14, %17 : vector<1x128xf32>
    %c6 = arith.constant 6 : index
    %19 = memref.load %arg1[%c6] : memref<16xf32, #tpu.memory_space<smem>>
    %20 = vector.broadcast %19 : f32 to vector<1x128xf32>
    %21 = arith.mulf %7, %20 : vector<1x128xf32>
    %22 = arith.addf %18, %21 : vector<1x128xf32>
    %c8 = arith.constant 8 : index
    %23 = memref.load %arg1[%c8] : memref<16xf32, #tpu.memory_space<smem>>
    %24 = vector.broadcast %23 : f32 to vector<1x128xf32>
    %25 = arith.addf %22, %24 : vector<1x128xf32>
    %c1_10 = arith.constant 1 : index
    %26 = memref.load %arg1[%c1_10] : memref<16xf32, #tpu.memory_space<smem>>
    %27 = vector.broadcast %26 : f32 to vector<1x128xf32>
    %28 = arith.mulf %1, %27 : vector<1x128xf32>
    %c3_11 = arith.constant 3 : index
    %29 = memref.load %arg1[%c3_11] : memref<16xf32, #tpu.memory_space<smem>>
    %30 = vector.broadcast %29 : f32 to vector<1x128xf32>
    %31 = arith.mulf %3, %30 : vector<1x128xf32>
    %32 = arith.addf %28, %31 : vector<1x128xf32>
    %c5 = arith.constant 5 : index
    %33 = memref.load %arg1[%c5] : memref<16xf32, #tpu.memory_space<smem>>
    %34 = vector.broadcast %33 : f32 to vector<1x128xf32>
    %35 = arith.mulf %5, %34 : vector<1x128xf32>
    %36 = arith.addf %32, %35 : vector<1x128xf32>
    %c7 = arith.constant 7 : index
    %37 = memref.load %arg1[%c7] : memref<16xf32, #tpu.memory_space<smem>>
    %38 = vector.broadcast %37 : f32 to vector<1x128xf32>
    %39 = arith.mulf %7, %38 : vector<1x128xf32>
    %40 = arith.addf %36, %39 : vector<1x128xf32>
    %c9 = arith.constant 9 : index
    %41 = memref.load %arg1[%c9] : memref<16xf32, #tpu.memory_space<smem>>
    %42 = vector.broadcast %41 : f32 to vector<1x128xf32>
    %43 = arith.addf %40, %42 : vector<1x128xf32>
    %cst = arith.constant 0.000000e+00 : f32
    %44 = vector.broadcast %cst : f32 to vector<1x128xf32>
    %45 = arith.maximumf %25, %44 : vector<1x128xf32>
    %cst_12 = arith.constant 0.000000e+00 : f32
    %46 = vector.broadcast %cst_12 : f32 to vector<1x128xf32>
    %47 = arith.maximumf %43, %46 : vector<1x128xf32>
    %c10 = arith.constant 10 : index
    %48 = memref.load %arg1[%c10] : memref<16xf32, #tpu.memory_space<smem>>
    %49 = vector.broadcast %48 : f32 to vector<1x128xf32>
    %50 = arith.mulf %45, %49 : vector<1x128xf32>
    %c11 = arith.constant 11 : index
    %51 = memref.load %arg1[%c11] : memref<16xf32, #tpu.memory_space<smem>>
    %52 = vector.broadcast %51 : f32 to vector<1x128xf32>
    %53 = arith.mulf %47, %52 : vector<1x128xf32>
    %54 = arith.addf %50, %53 : vector<1x128xf32>
    %c12 = arith.constant 12 : index
    %55 = memref.load %arg1[%c12] : memref<16xf32, #tpu.memory_space<smem>>
    %56 = vector.broadcast %55 : f32 to vector<1x128xf32>
    %57 = arith.addf %54, %56 : vector<1x128xf32>
    %c0_13 = arith.constant 0 : index
    %c0_14 = arith.constant 0 : index
    %58 = vector.load %arg3[%c0_13, %c0_14] : memref<1x128xf32, #tpu.memory_space<vmem>>, vector<1x128xf32>
    tpu.vector_store %arg3[%c0_13, %c0_14], %57 {strides = array<i32>} : memref<1x128xf32, #tpu.memory_space<vmem>>, vector<1x128xf32>,
    return
  }
  func.func @transform_0(%arg0: i32) -> i32 {
    %c0_i32 = arith.constant 0 : i32
    %c0_i32_0 = arith.constant 0 : i32
    return %c0_i32 : i32
  }
  func.func @transform_1(%arg0: i32) -> (i32, i32, i32) {
    %c0_i32 = arith.constant 0 : i32
    %c0_i32_0 = arith.constant 0 : i32
    %c0_i32_1 = arith.constant 0 : i32
    return %c0_i32, %arg0, %c0_i32_0 : i32, i32, i32
  }
  func.func @transform_2(%arg0: i32) -> (i32, i32) {
    %c0_i32 = arith.constant 0 : i32
    %c0_i32_0 = arith.constant 0 : i32
    return %arg0, %c0_i32 : i32, i32
  }
}

</mosaic_0001>

<llo_original>
// kernel: mymodel_forward.1
$region0: #{mymodel_forward.1}
  #allocation0 [shape = 'u32[]', space=smem, size = 0x4, offset = 0x4, fixed_abs, tag = 'smem constant byte address 0x4 - core index']
  #allocation1 [shape = 'u32[144,128]{1,0:T(1,128)}', space=vmem, size = 0x12000, scoped, tag = 'internal scratch']
  %s0 = inlined_call_operand.vmem [shape: f32[16], index: 0, kind: input, shape index: {}]
  %s1 = inlined_call_operand.vmem [shape: f32[4,1,128], index: 1, kind: input, shape index: {}]
  %s2 = inlined_call_operand.vmem [shape: f32[1,128], index: 2, kind: output, shape index: {}]
  %s3 = sld [smem:[#allocation0]]
  $region22: #{mymodel_forward.1} parent=0
    _
  %s5 = ssub.s32 1, %s3
  %s6 = scalar_select 0, %s5, %s3
  $region1: #{mymodel_forward.1} parent=0
    #allocation2 [shape = 'u8[512]{0}', space=smem, size = 0x200, scoped, tag = 'input window, operand 0, single buffered']
    #allocation3 [shape = 's32[1]{0}', space=sflag, size = 0x4, scoped, tag = 'scoped memory for mymodel_forward.1']
    %7 = vsyncpa [#allocation3], 0
    // Predicated region
    $region2: #{mymodel_forward.1} parent=1 // pred_check
      _
    $region3: #{mymodel_forward.1} parent=1 // pred_check_branch
      %9 = sbr.rel (0) target = $region5
    $region4: #{mymodel_forward.1} parent=1 // pred_region
      %s11 = ssub.s32 16, 16
      %12 = vsyncadd [#allocation3], %s11
      %s14 = sshll.u32 %s0, 4
      %s15 = int_to_ptr.vmem [resolvable:$true] %s14
      %17 = dma.vmem_to_smem %s15, 16, [#allocation2], [#allocation3]
    $region5: #{mymodel_forward.1} parent=1 // pred_fallthru
      _
    // Predicated region
    $region6: #{mymodel_forward.1} parent=1 // pred_check
      _
    $region7: #{mymodel_forward.1} parent=1 // pred_check_branch
      %19 = sbr.rel (0) target = $region9
    $region8: #{mymodel_forward.1} parent=1 // pred_region
      _
    $region9: #{mymodel_forward.1} parent=1 // pred_fallthru
      _
    // Predicated region
    $region10: #{mymodel_forward.1} parent=1 // pred_check
      _
    $region11: #{mymodel_forward.1} parent=1 // pred_check_branch
      %21 = sbr.rel (0) target = $region13
    $region12: #{mymodel_forward.1} parent=1 // pred_region
      %22 = dma.done [#allocation3], 16
    $region13: #{mymodel_forward.1} parent=1 // pred_fallthru
      _
    %23 = sfence
    %v24 = vld [vmem:[%s1] sm:$0x1]
    %s25 = scalar_lea.vmem %s1, 1
    %v26 = vld [vmem:[%s25] sm:$0x1]
    %s27 = scalar_lea.vmem %s1, 2
    %v28 = vld [vmem:[%s27] sm:$0x1]
    %s29 = scalar_lea.vmem %s1, 3
    %v30 = vld [vmem:[%s29] sm:$0x1]
    %s31 = sld [smem:[#allocation2]]
    %v32 = vstv %s31
    %v33 = vmul.f32 %v24, %v32
    %s34 = sld [smem:[#allocation2 + $0x2]]
    %v35 = vstv %s34
    %v36 = vmul.f32 %v26, %v35
    %v37 = vadd.f32 %v33, %v36
    %s38 = sld [smem:[#allocation2 + $0x4]]
    %v39 = vstv %s38
    %v40 = vmul.f32 %v28, %v39
    %v41 = vadd.f32 %v37, %v40
    %s42 = sld [smem:[#allocation2 + $0x6]]
    %v43 = vstv %s42
    %v44 = vmul.f32 %v30, %v43
    %v45 = vadd.f32 %v41, %v44
    %s46 = sld [smem:[#allocation2 + $0x8]]
    %v47 = vstv %s46
    %v48 = vadd.f32 %v45, %v47
    %s49 = sld [smem:[#allocation2 + $0x1]]
    %v50 = vstv %s49
    %v51 = vmul.f32 %v24, %v50
    %s52 = sld [smem:[#allocation2 + $0x3]]
    %v53 = vstv %s52
    %v54 = vmul.f32 %v26, %v53
    %v55 = vadd.f32 %v51, %v54
    %s56 = sld [smem:[#allocation2 + $0x5]]
    %v57 = vstv %s56
    %v58 = vmul.f32 %v28, %v57
    %v59 = vadd.f32 %v55, %v58
    %s60 = sld [smem:[#allocation2 + $0x7]]
    %v61 = vstv %s60
    %v62 = vmul.f32 %v30, %v61
    %v63 = vadd.f32 %v59, %v62
    %s64 = sld [smem:[#allocation2 + $0x9]]
    %v65 = vstv %s64
    %v66 = vadd.f32 %v63, %v65
    %v67 = vmax.f32 %v48, 0.0
    %v68 = vmax.f32 %v66, 0.0
    %s69 = sld [smem:[#allocation2 + $0xa]]
    %v70 = vstv %s69
    %v71 = vmul.f32 %v67, %v70
    %s72 = sld [smem:[#allocation2 + $0xb]]
    %v73 = vstv %s72
    %v74 = vmul.f32 %v68, %v73
    %v75 = vadd.f32 %v71, %v74
    %s76 = sld [smem:[#allocation2 + $0xc]]
    %v77 = vstv %s76
    %v78 = vadd.f32 %v75, %v77
    %79 = vst [vmem:[%s2] sm:$0x1] %v78
    // Predicated region
    $region14: #{mymodel_forward.1} parent=1 // pred_check
      _
    $region15: #{mymodel_forward.1} parent=1 // pred_check_branch
      %81 = sbr.rel (0) target = $region17
    $region16: #{mymodel_forward.1} parent=1 // pred_region
      _
    $region17: #{mymodel_forward.1} parent=1 // pred_fallthru
      _
    // Predicated region
    $region18: #{mymodel_forward.1} parent=1 // pred_check
      _
    $region19: #{mymodel_forward.1} parent=1 // pred_check_branch
      %83 = sbr.rel (0) target = $region21
    $region20: #{mymodel_forward.1} parent=1 // pred_region
      _
    $region21: #{mymodel_forward.1} parent=1 // pred_fallthru
      _
    %84 = vsyncpa [#allocation3], 1

</llo_original>
